<compile_context>
chip_gen: v5e
topology: v5e:2x2
jax: 0.10.0
libtpu: 0.0.40
codegen_flags: <defaults>
</compile_context>

<pallas_src>
import functools

import numpy as np
import jax
import jax.numpy as jnp
from jax import lax
from jax.experimental import pallas as pl
from jax.experimental.pallas import tpu as pltpu


def _smooth_loss_kernel(mask_ref, y_ref, out_ref, *, inv_denom):
    i = pl.program_id(0)
    nb = pl.num_programs(0)

    x = y_ref[...].astype(jnp.float32)        # (bb, C, H, W); cast in-kernel
    m = mask_ref[...].astype(jnp.float32)     # (H, W)

    bb, C, H, W = x.shape

    # --- 5-point Laplacian with zero padding (matches conv2d padding=1) -----
    zero_col = jnp.zeros((bb, C, H, 1), jnp.float32)
    zero_row = jnp.zeros((bb, C, 1, W), jnp.float32)
    left = jnp.concatenate([zero_col, x[:, :, :, :-1]], axis=-1)   # x[i, j-1]
    right = jnp.concatenate([x[:, :, :, 1:], zero_col], axis=-1)   # x[i, j+1]
    up = jnp.concatenate([zero_row, x[:, :, :-1, :]], axis=-2)     # x[i-1, j]
    down = jnp.concatenate([x[:, :, 1:, :], zero_row], axis=-2)    # x[i+1, j]
    lap = 4.0 * x - left - right - up - down                       # (bb,C,H,W)

    # --- masked per-pixel L2 norm over channels (unrolled, VPU-only) --------
    md = lap * m                               # mask broadcasts over (bb, C)
    sq = md[:, 0] * md[:, 0]
    for c in range(1, C):                      # C == 3, unrolled at trace time
        sq = sq + md[:, c] * md[:, c]
    dist = jnp.sqrt(sq)                        # (bb, H, W)
    block_sum = jnp.sum(dist)

    # --- accumulate into resident (1, 1) output block ------------------------
    @pl.when(i == 0)
    def _init():
        out_ref[...] = jnp.zeros_like(out_ref)

    out_ref[...] = out_ref[...] + block_sum

    @pl.when(i == nb - 1)
    def _finalize():
        out_ref[...] = out_ref[...] * inv_denom


def smooth_loss(y_pred, face_mask, *, max_batch_block=8):
    """y_pred: (B, C, H, W), any float dtype. face_mask: (H, W). Returns f32 scalar."""
    B, C, H, W = y_pred.shape

    # Largest batch block <= max_batch_block that divides B: keeps every block
    # full (exact mean) and keeps double-buffered blocks small enough for v7x.
    block_b = 1
    for d in range(1, min(B, max_batch_block) + 1):
        if B % d == 0:
            block_b = d

    kernel = functools.partial(
        _smooth_loss_kernel, inv_denom=1.0 / float(B * H * W))

    out = pl.pallas_call(
        kernel,
        out_shape=jax.ShapeDtypeStruct((1, 1), jnp.float32),
        grid=(B // block_b,),
        in_specs=[
            pl.BlockSpec((H, W), lambda i: (0, 0)),                  # mask (resident)
            pl.BlockSpec((block_b, C, H, W), lambda i: (i, 0, 0, 0)),
        ],
        out_specs=pl.BlockSpec((1, 1), lambda i: (0, 0)),
        compiler_params=pltpu.CompilerParams(
            dimension_semantics=("arbitrary",),   # batch axis is a reduction
        ),
    )(face_mask, y_pred)
    return out[0, 0]


def smooth_loss_ref(y_pred, face_mask):
    """Pure-JAX reference mirroring the PyTorch forward (depthwise conv2d)."""
    x = y_pred.astype(jnp.float32)
    C = x.shape[1]
    k = jnp.array([[0.0, -1.0, 0.0], [-1.0, 4.0, -1.0], [0.0, -1.0, 0.0]],
                  jnp.float32)
    kernel = jnp.broadcast_to(k, (C, 1, 3, 3))
    diff = lax.conv_general_dilated(
        x, kernel, window_strides=(1, 1), padding=((1, 1), (1, 1)),
        dimension_numbers=("NCHW", "OIHW", "NCHW"),
        feature_group_count=C, precision=lax.Precision.HIGHEST)
    dist = jnp.sqrt(jnp.sum((diff * face_mask.astype(jnp.float32)) ** 2, axis=1))
    return jnp.mean(dist)


if __name__ == "__main__":
    B, C, H, W = 2, 3, 16, 16
    key = jax.random.PRNGKey(0)
    k1, k2 = jax.random.split(key)

    y_pred = jax.random.normal(k1, (B, C, H, W), jnp.float32)
    # Synthetic stand-in for the module's global `face_mask_np`: 0/1 float map.
    face_mask = (jax.random.uniform(k2, (H, W)) > 0.4).astype(jnp.float32)

    out = jax.block_until_ready(smooth_loss(y_pred, face_mask))
    ref = jax.block_until_ready(smooth_loss_ref(y_pred, face_mask))

    np.testing.assert_allclose(np.asarray(out), np.asarray(ref),
                               rtol=1e-5, atol=1e-6)
    print("KERNEL_OK")
</pallas_src>

<mosaic_0001>
module attributes {stable_mosaic.version = 11 : i64} {
  func.func @_smooth_loss_kernel(%arg0: i32, %arg1: memref<16x16xf32, #tpu.memory_space<vmem>>, %arg2: memref<2x3x16x16xf32, #tpu.memory_space<vmem>>, %arg3: memref<1x1xf32, #tpu.memory_space<vmem>>) attributes {dimension_semantics = [#tpu.dimension_semantics<arbitrary>], iteration_bounds = array<i64: 1>, scalar_prefetch = 0 : i64, scratch_operands = 0 : i64, tpu.core_type = #tpu.core_type<tc>, window_params = [{pipeline_mode = #tpu.pipeline_mode<synchronous>, transform_indices = @transform_0, window_bounds = array<i64: 16, 16>}, {transform_indices = @transform_1, window_bounds = array<i64: 2, 3, 16, 16>}, {pipeline_mode = #tpu.pipeline_mode<synchronous>, transform_indices = @transform_2, window_bounds = array<i64: 1, 1>}]} {
    %c0 = arith.constant 0 : index
    %c0_0 = arith.constant 0 : index
    %c0_1 = arith.constant 0 : index
    %c0_2 = arith.constant 0 : index
    %0 = vector.load %arg2[%c0, %c0_0, %c0_1, %c0_2] : memref<2x3x16x16xf32, #tpu.memory_space<vmem>>, vector<2x3x16x16xf32>
    %c0_3 = arith.constant 0 : index
    %c0_4 = arith.constant 0 : index
    %1 = vector.load %arg1[%c0_3, %c0_4] : memref<16x16xf32, #tpu.memory_space<vmem>>, vector<16x16xf32>
    %cst = arith.constant 0.000000e+00 : f32
    %2 = vector.broadcast %cst : f32 to vector<2x3x16x1xf32>
    %cst_5 = arith.constant 0.000000e+00 : f32
    %3 = vector.broadcast %cst_5 : f32 to vector<2x3x1x16xf32>
    %4 = vector.extract_strided_slice %0 {offsets = [0, 0, 0, 0], sizes = [2, 3, 16, 15], strides = [1, 1, 1, 1]} : vector<2x3x16x16xf32> to vector<2x3x16x15xf32>
    %5 = tpu.concatenate %2, %4 in 3 : vector<2x3x16x1xf32>, vector<2x3x16x15xf32> -> vector<2x3x16x16xf32>
    %6 = vector.extract_strided_slice %0 {offsets = [0, 0, 0, 1], sizes = [2, 3, 16, 15], strides = [1, 1, 1, 1]} : vector<2x3x16x16xf32> to vector<2x3x16x15xf32>
    %7 = tpu.concatenate %6, %2 in 3 : vector<2x3x16x15xf32>, vector<2x3x16x1xf32> -> vector<2x3x16x16xf32>
    %8 = vector.extract_strided_slice %0 {offsets = [0, 0, 0, 0], sizes = [2, 3, 15, 16], strides = [1, 1, 1, 1]} : vector<2x3x16x16xf32> to vector<2x3x15x16xf32>
    %9 = tpu.concatenate %3, %8 in 2 : vector<2x3x1x16xf32>, vector<2x3x15x16xf32> -> vector<2x3x16x16xf32>
    %10 = vector.extract_strided_slice %0 {offsets = [0, 0, 1, 0], sizes = [2, 3, 15, 16], strides = [1, 1, 1, 1]} : vector<2x3x16x16xf32> to vector<2x3x15x16xf32>
    %11 = tpu.concatenate %10, %3 in 2 : vector<2x3x15x16xf32>, vector<2x3x1x16xf32> -> vector<2x3x16x16xf32>
    %cst_6 = arith.constant 4.000000e+00 : f32
    %12 = vector.broadcast %cst_6 : f32 to vector<2x3x16x16xf32>
    %13 = arith.mulf %12, %0 : vector<2x3x16x16xf32>
    %14 = arith.subf %13, %5 : vector<2x3x16x16xf32>
    %15 = arith.subf %14, %7 : vector<2x3x16x16xf32>
    %16 = arith.subf %15, %9 : vector<2x3x16x16xf32>
    %17 = arith.subf %16, %11 : vector<2x3x16x16xf32>
    %18 = vector.shape_cast %1 : vector<16x16xf32> to vector<1x1x16x16xf32>
    %19 = vector.broadcast %18 : vector<1x1x16x16xf32> to vector<2x3x16x16xf32>
    %20 = arith.mulf %17, %19 : vector<2x3x16x16xf32>
    %21 = vector.extract_strided_slice %20 {offsets = [0, 0, 0, 0], sizes = [2, 1, 16, 16], strides = [1, 1, 1, 1]} : vector<2x3x16x16xf32> to vector<2x1x16x16xf32>
    %22 = vector.shape_cast %21 : vector<2x1x16x16xf32> to vector<2x16x16xf32>
    %23 = vector.extract_strided_slice %20 {offsets = [0, 0, 0, 0], sizes = [2, 1, 16, 16], strides = [1, 1, 1, 1]} : vector<2x3x16x16xf32> to vector<2x1x16x16xf32>
    %24 = vector.shape_cast %23 : vector<2x1x16x16xf32> to vector<2x16x16xf32>
    %25 = arith.mulf %22, %24 : vector<2x16x16xf32>
    %26 = vector.extract_strided_slice %20 {offsets = [0, 1, 0, 0], sizes = [2, 1, 16, 16], strides = [1, 1, 1, 1]} : vector<2x3x16x16xf32> to vector<2x1x16x16xf32>
    %27 = vector.shape_cast %26 : vector<2x1x16x16xf32> to vector<2x16x16xf32>
    %28 = vector.extract_strided_slice %20 {offsets = [0, 1, 0, 0], sizes = [2, 1, 16, 16], strides = [1, 1, 1, 1]} : vector<2x3x16x16xf32> to vector<2x1x16x16xf32>
    %29 = vector.shape_cast %28 : vector<2x1x16x16xf32> to vector<2x16x16xf32>
    %30 = arith.mulf %27, %29 : vector<2x16x16xf32>
    %31 = arith.addf %25, %30 : vector<2x16x16xf32>
    %32 = vector.extract_strided_slice %20 {offsets = [0, 2, 0, 0], sizes = [2, 1, 16, 16], strides = [1, 1, 1, 1]} : vector<2x3x16x16xf32> to vector<2x1x16x16xf32>
    %33 = vector.shape_cast %32 : vector<2x1x16x16xf32> to vector<2x16x16xf32>
    %34 = vector.extract_strided_slice %20 {offsets = [0, 2, 0, 0], sizes = [2, 1, 16, 16], strides = [1, 1, 1, 1]} : vector<2x3x16x16xf32> to vector<2x1x16x16xf32>
    %35 = vector.shape_cast %34 : vector<2x1x16x16xf32> to vector<2x16x16xf32>
    %36 = arith.mulf %33, %35 : vector<2x16x16xf32>
    %37 = arith.addf %31, %36 : vector<2x16x16xf32>
    %38 = math.sqrt %37 : vector<2x16x16xf32>
    %39 = vector.shape_cast %38 : vector<2x16x16xf32> to vector<1x2x16x16xf32>
    %cst_7 = arith.constant dense<0.000000e+00> : vector<1xf32>
    %40 = vector.multi_reduction <add>, %39, %cst_7 [1, 2, 3] : vector<1x2x16x16xf32> to vector<1xf32>
    %41 = vector.shape_cast %40 : vector<1xf32> to vector<1x1x1x1xf32>
    %42 = vector.extract %41[0, 0, 0, 0] : f32 from vector<1x1x1x1xf32>
    %c0_i32 = arith.constant 0 : i32
    %43 = arith.cmpi eq, %arg0, %c0_i32 : i32
    %44 = arith.extui %43 : i1 to i32
    %c0_i32_8 = arith.constant 0 : i32
    %45 = arith.cmpi ne, %44, %c0_i32_8 : i32
    scf.if %45 {
      %cst_15 = arith.constant 0.000000e+00 : f32
      %53 = vector.broadcast %cst_15 : f32 to vector<1x1xf32>
      %c0_16 = arith.constant 0 : index
      %c0_17 = arith.constant 0 : index
      %54 = vector.load %arg3[%c0_16, %c0_17] : memref<1x1xf32, #tpu.memory_space<vmem>>, vector<1x1xf32>
      tpu.vector_store %arg3[%c0_16, %c0_17], %53 {strides = array<i32>} : memref<1x1xf32, #tpu.memory_space<vmem>>, vector<1x1xf32>,
    } else {
    }
    %c0_9 = arith.constant 0 : index
    %c0_10 = arith.constant 0 : index
    %46 = vector.load %arg3[%c0_9, %c0_10] : memref<1x1xf32, #tpu.memory_space<vmem>>, vector<1x1xf32>
    %47 = vector.broadcast %42 : f32 to vector<1x1xf32>
    %48 = arith.addf %46, %47 : vector<1x1xf32>
    %c0_11 = arith.constant 0 : index
    %c0_12 = arith.constant 0 : index
    %49 = vector.load %arg3[%c0_11, %c0_12] : memref<1x1xf32, #tpu.memory_space<vmem>>, vector<1x1xf32>
    tpu.vector_store %arg3[%c0_11, %c0_12], %48 {strides = array<i32>} : memref<1x1xf32, #tpu.memory_space<vmem>>, vector<1x1xf32>,
    %c0_i32_13 = arith.constant 0 : i32
    %50 = arith.cmpi eq, %arg0, %c0_i32_13 : i32
    %51 = arith.extui %50 : i1 to i32
    %c0_i32_14 = arith.constant 0 : i32
    %52 = arith.cmpi ne, %51, %c0_i32_14 : i32
    scf.if %52 {
      %c0_15 = arith.constant 0 : index
      %c0_16 = arith.constant 0 : index
      %53 = vector.load %arg3[%c0_15, %c0_16] : memref<1x1xf32, #tpu.memory_space<vmem>>, vector<1x1xf32>
      %cst_17 = arith.constant 0.001953125 : f32
      %54 = vector.broadcast %cst_17 : f32 to vector<1x1xf32>
      %55 = arith.mulf %53, %54 : vector<1x1xf32>
      %c0_18 = arith.constant 0 : index
      %c0_19 = arith.constant 0 : index
      %56 = vector.load %arg3[%c0_18, %c0_19] : memref<1x1xf32, #tpu.memory_space<vmem>>, vector<1x1xf32>
      tpu.vector_store %arg3[%c0_18, %c0_19], %55 {strides = array<i32>} : memref<1x1xf32, #tpu.memory_space<vmem>>, vector<1x1xf32>,
    } else {
    }
    return
  }
  func.func @transform_0(%arg0: i32) -> (i32, i32) {
    %c0_i32 = arith.constant 0 : i32
    %c0_i32_0 = arith.constant 0 : i32
    %c0_i32_1 = arith.constant 0 : i32
    return %c0_i32, %c0_i32_0 : i32, i32
  }
  func.func @transform_1(%arg0: i32) -> (i32, i32, i32, i32) {
    %c0_i32 = arith.constant 0 : i32
    %c0_i32_0 = arith.constant 0 : i32
    %c0_i32_1 = arith.constant 0 : i32
    %c0_i32_2 = arith.constant 0 : i32
    return %arg0, %c0_i32, %c0_i32_0, %c0_i32_1 : i32, i32, i32, i32
  }
  func.func @transform_2(%arg0: i32) -> (i32, i32) {
    %c0_i32 = arith.constant 0 : i32
    %c0_i32_0 = arith.constant 0 : i32
    %c0_i32_1 = arith.constant 0 : i32
    return %c0_i32, %c0_i32_0 : i32, i32
  }
}

</mosaic_0001>

<llo_original>
// kernel: tpu_custom_call.1
$region0: #{tpu_custom_call.1}
  #allocation0 [shape = 'u32[]', space=smem, size = 0x4, offset = 0x4, fixed_abs, tag = 'smem constant byte address 0x4 - core index']
  #allocation1 [shape = 'u32[72,128]{1,0:T(1,128)}', space=vmem, size = 0x9000, scoped, tag = 'internal scratch']
  %s0 = inlined_call_operand.hbm [shape: f32[16,16], index: 0, kind: input, shape index: {}]
  %s1 = inlined_call_operand.hbm [shape: f32[2,3,16,16], index: 1, kind: input, shape index: {}]
  %s2 = inlined_call_operand.hbm [shape: f32[1,1], index: 2, kind: output, shape index: {}]
  %s3 = sld [smem:[#allocation0]]
  $region34: #{tpu_custom_call.1} parent=0
    _
  %s5 = ssub.s32 1, %s3
  %s6 = scalar_select 0, %s5, %s3
  $region1: #{tpu_custom_call.1} parent=0
    #allocation2 [shape = 'u8[8192]{0}', space=vmem, size = 0x2000, scoped, tag = 'input window, operand 0, single buffered']
    #allocation3 [shape = 's32[1]{0}', space=sflag, size = 0x4, scoped, tag = 'scoped memory for tpu_custom_call.1']
    #allocation4 [shape = 's32[1]{0}', space=sflag, size = 0x4, scoped, tag = 'scoped memory for tpu_custom_call.1']
    #allocation5 [shape = 'u8[49152]{0}', space=vmem, size = 0xc000, scoped, tag = 'input window, operand 1, single buffered']
    #allocation6 [shape = 's32[1]{0}', space=sflag, size = 0x4, scoped, tag = 'scoped memory for tpu_custom_call.1']
    #allocation7 [shape = 'u8[512]{0}', space=vmem, size = 0x400, scoped, tag = 'output window, operand 0, single buffered']
    %7 = vsyncpa [#allocation3], 0
    %8 = vsyncpa [#allocation6], 0
    %9 = vsyncpa [#allocation4], 0
    // Predicated region
    $region2: #{tpu_custom_call.1} parent=1 // pred_check
      _
    $region3: #{tpu_custom_call.1} parent=1 // pred_check_branch
      %11 = sbr.rel (0) target = $region5
    $region4: #{tpu_custom_call.1} parent=1 // pred_region
      %13 = vsyncadd [#allocation3], 0
      %s14 = sshll.u32 %s0, 4
      %s15 = int_to_ptr.hbm [resolvable:$true] %s14
      %s16 = sshll.u32 [#allocation2], 4
      %s17 = int_to_ptr.vmem [resolvable:$true] %s16
      %22 = dma.hbm_to_vmem [thread:$0]  %s15, 256, %s17, [#allocation3], 128, 128, 8
    $region5: #{tpu_custom_call.1} parent=1 // pred_fallthru
      _
    // Predicated region
    $region6: #{tpu_custom_call.1} parent=1 // pred_check
      _
    $region7: #{tpu_custom_call.1} parent=1 // pred_check_branch
      %24 = sbr.rel (0) target = $region9
    $region8: #{tpu_custom_call.1} parent=1 // pred_region
      %26 = vsyncadd [#allocation6], 0
      %s27 = sshll.u32 %s1, 4
      %s28 = int_to_ptr.hbm [resolvable:$true] %s27
      %s29 = sshll.u32 [#allocation5], 4
      %s30 = int_to_ptr.vmem [resolvable:$true] %s29
      %35 = dma.hbm_to_vmem [thread:$0]  %s28, 1536, %s30, [#allocation6], 128, 128, 8
    $region9: #{tpu_custom_call.1} parent=1 // pred_fallthru
      _
    // Predicated region
    $region10: #{tpu_custom_call.1} parent=1 // pred_check
      _
    $region11: #{tpu_custom_call.1} parent=1 // pred_check_branch
      %37 = sbr.rel (0) target = $region13
    $region12: #{tpu_custom_call.1} parent=1 // pred_region
      %39 = dma.done [#allocation3], 256
    $region13: #{tpu_custom_call.1} parent=1 // pred_fallthru
      _
    // Predicated region
    $region14: #{tpu_custom_call.1} parent=1 // pred_check
      _
    $region15: #{tpu_custom_call.1} parent=1 // pred_check_branch
      %41 = sbr.rel (0) target = $region17
    $region16: #{tpu_custom_call.1} parent=1 // pred_region
      %43 = dma.done [#allocation6], 1536
    $region17: #{tpu_custom_call.1} parent=1 // pred_fallthru
      _
    %v44 = vld [vmem:[#allocation5] sm:$0xff]
    %v45 = vld [vmem:[#allocation5 + $0x8] sm:$0xff]
    %v46 = vld [vmem:[#allocation5 + $0x10] sm:$0xff]
    %v47 = vld [vmem:[#allocation5 + $0x18] sm:$0xff]
    %v48 = vld [vmem:[#allocation5 + $0x20] sm:$0xff]
    %v49 = vld [vmem:[#allocation5 + $0x28] sm:$0xff]
    %v50 = vld [vmem:[#allocation5 + $0x30] sm:$0xff]
    %v51 = vld [vmem:[#allocation5 + $0x38] sm:$0xff]
    %v52 = vld [vmem:[#allocation5 + $0x40] sm:$0xff]
    %v53 = vld [vmem:[#allocation5 + $0x48] sm:$0xff]
    %v54 = vld [vmem:[#allocation5 + $0x50] sm:$0xff]
    %v55 = vld [vmem:[#allocation5 + $0x58] sm:$0xff]
    %v56 = vld [vmem:[#allocation2] sm:$0xff]
    %v57 = vld [vmem:[#allocation2 + $0x8] sm:$0xff]
    %70 = vrot.lane.b32.xlu0 %v44, 1
    %v71 = vpop.permute.xlu0 %70
    %72 = vrot.lane.b32.xlu0 %v45, 1
    %v73 = vpop.permute.xlu0 %72
    %74 = vrot.lane.b32.xlu0 %v46, 1
    %v75 = vpop.permute.xlu0 %74
    %76 = vrot.lane.b32.xlu0 %v47, 1
    %v77 = vpop.permute.xlu0 %76
    %78 = vrot.lane.b32.xlu0 %v48, 1
    %v79 = vpop.permute.xlu0 %78
    %80 = vrot.lane.b32.xlu0 %v49, 1
    %v81 = vpop.permute.xlu0 %80
    %82 = vrot.lane.b32.xlu0 %v50, 1
    %v83 = vpop.permute.xlu0 %82
    %84 = vrot.lane.b32.xlu0 %v51, 1
    %v85 = vpop.permute.xlu0 %84
    %86 = vrot.lane.b32.xlu0 %v52, 1
    %v87 = vpop.permute.xlu0 %86
    %88 = vrot.lane.b32.xlu0 %v53, 1
    %v89 = vpop.permute.xlu0 %88
    %90 = vrot.lane.b32.xlu0 %v54, 1
    %v91 = vpop.permute.xlu0 %90
    %92 = vrot.lane.b32.xlu0 %v55, 1
    %v93 = vpop.permute.xlu0 %92
    %vm106 = vcmask 7168
    %v107 = vsel %vm106, 0.0, %v71
    %v108 = vsel %vm106, 0.0, %v73
    %v109 = vsel %vm106, 0.0, %v75
    %v110 = vsel %vm106, 0.0, %v77
    %v111 = vsel %vm106, 0.0, %v79
    %v112 = vsel %vm106, 0.0, %v81
    %v113 = vsel %vm106, 0.0, %v83
    %v114 = vsel %vm106, 0.0, %v85
    %v115 = vsel %vm106, 0.0, %v87
    %v116 = vsel %vm106, 0.0, %v89
    %v117 = vsel %vm106, 0.0, %v91
    %v118 = vsel %vm106, 0.0, %v93
    %119 = vrot.lane.b32.xlu0 %v44, 127
    %v120 = vpop.permute.xlu0 %119
    %121 = vrot.lane.b32.xlu0 %v45, 127
    %v122 = vpop.permute.xlu0 %121
    %123 = vrot.lane.b32.xlu0 %v46, 127
    %v124 = vpop.permute.xlu0 %123
    %125 = vrot.lane.b32.xlu0 %v47, 127
    %v126 = vpop.permute.xlu0 %125
    %127 = vrot.lane.b32.xlu0 %v48, 127
    %v128 = vpop.permute.xlu0 %127
    %129 = vrot.lane.b32.xlu0 %v49, 127
    %v130 = vpop.permute.xlu0 %129
    %131 = vrot.lane.b32.xlu0 %v50, 127
    %v132 = vpop.permute.xlu0 %131
    %133 = vrot.lane.b32.xlu0 %v51, 127
    %v134 = vpop.permute.xlu0 %133
    %135 = vrot.lane.b32.xlu0 %v52, 127
    %v136 = vpop.permute.xlu0 %135
    %137 = vrot.lane.b32.xlu0 %v53, 127
    %v138 = vpop.permute.xlu0 %137
    %139 = vrot.lane.b32.xlu0 %v54, 127
    %v140 = vpop.permute.xlu0 %139
    %141 = vrot.lane.b32.xlu0 %v55, 127
    %v142 = vpop.permute.xlu0 %141
    %vm155 = vcmask 121856
    %v156 = vsel %vm155, %v120, 0.0
    %v157 = vsel %vm155, %v122, 0.0
    %v158 = vsel %vm155, %v124, 0.0
    %v159 = vsel %vm155, %v126, 0.0
    %v160 = vsel %vm155, %v128, 0.0
    %v161 = vsel %vm155, %v130, 0.0
    %v162 = vsel %vm155, %v132, 0.0
    %v163 = vsel %vm155, %v134, 0.0
    %v164 = vsel %vm155, %v136, 0.0
    %v165 = vsel %vm155, %v138, 0.0
    %v166 = vsel %vm155, %v140, 0.0
    %v167 = vsel %vm155, %v142, 0.0
    %vm168 = vcmask 1040384
    %v169 = vrot.slane %v44, 7
    %v170 = vrot.slane %v45, 7
    %v171 = vsel %vm168, %v169, %v170
    %v172 = vrot.slane %v46, 7
    %v173 = vrot.slane %v47, 7
    %v174 = vsel %vm168, %v172, %v173
    %v175 = vrot.slane %v48, 7
    %v176 = vrot.slane %v49, 7
    %v177 = vsel %vm168, %v175, %v176
    %v178 = vrot.slane %v50, 7
    %v179 = vrot.slane %v51, 7
    %v180 = vsel %vm168, %v178, %v179
    %v181 = vrot.slane %v52, 7
    %v182 = vrot.slane %v53, 7
    %v183 = vsel %vm168, %v181, %v182
    %v184 = vrot.slane %v54, 7
    %v185 = vrot.slane %v55, 7
    %v186 = vsel %vm168, %v184, %v185
    %v199 = vsel %vm168, 0.0, %v169
    %v200 = vsel %vm168, 0.0, %v172
    %v201 = vsel %vm168, 0.0, %v175
    %v202 = vsel %vm168, 0.0, %v178
    %v203 = vsel %vm168, 0.0, %v181
    %v204 = vsel %vm168, 0.0, %v184
    %vm205 = vcmask 1046528
    %v206 = vrot.slane %v44, 1
    %v207 = vrot.slane %v45, 1
    %v208 = vsel %vm205, %v206, %v207
    %v209 = vrot.slane %v46, 1
    %v210 = vrot.slane %v47, 1
    %v211 = vsel %vm205, %v209, %v210
    %v212 = vrot.slane %v48, 1
    %v213 = vrot.slane %v49, 1
    %v214 = vsel %vm205, %v212, %v213
    %v215 = vrot.slane %v50, 1
    %v216 = vrot.slane %v51, 1
    %v217 = vsel %vm205, %v215, %v216
    %v218 = vrot.slane %v52, 1
    %v219 = vrot.slane %v53, 1
    %v220 = vsel %vm205, %v218, %v219
    %v221 = vrot.slane %v54, 1
    %v222 = vrot.slane %v55, 1
    %v223 = vsel %vm205, %v221, %v222
    %v236 = vsel %vm205, %v207, 0.0
    %v237 = vsel %vm205, %v210, 0.0
    %v238 = vsel %vm205, %v213, 0.0
    %v239 = vsel %vm205, %v216, 0.0
    %v240 = vsel %vm205, %v219, 0.0
    %v241 = vsel %vm205, %v222, 0.0
    %v242 = vmul.f32 %v44, 4.0
    %v243 = vmul.f32 %v45, 4.0
    %v244 = vmul.f32 %v46, 4.0
    %v245 = vmul.f32 %v47, 4.0
    %v246 = vmul.f32 %v48, 4.0
    %v247 = vmul.f32 %v49, 4.0
    %v248 = vmul.f32 %v50, 4.0
    %v249 = vmul.f32 %v51, 4.0
    %v250 = vmul.f32 %v52, 4.0
    %v251 = vmul.f32 %v53, 4.0
    %v252 = vmul.f32 %v54, 4.0
    %v253 = vmul.f32 %v55, 4.0
    %v254 = vsub.f32 %v242, %v107
    %v255 = vsub.f32 %v243, %v108
    %v256 = vsub.f32 %v244, %v109
    %v257 = vsub.f32 %v245, %v110
    %v258 = vsub.f32 %v246, %v111
    %v259 = vsub.f32 %v247, %v112
    %v260 = vsub.f32 %v248, %v113
    %v261 = vsub.f32 %v249, %v114
    %v262 = vsub.f32 %v250, %v115
    %v263 = vsub.f32 %v251, %v116
    %v264 = vsub.f32 %v252, %v117
    %v265 = vsub.f32 %v253, %v118
    %v266 = vsub.f32 %v254, %v156
    %v267 = vsub.f32 %v255, %v157
    %v268 = vsub.f32 %v256, %v158
    %v269 = vsub.f32 %v257, %v159
    %v270 = vsub.f32 %v258, %v160
    %v271 = vsub.f32 %v259, %v161
    %v272 = vsub.f32 %v260, %v162
    %v273 = vsub.f32 %v261, %v163
    %v274 = vsub.f32 %v262, %v164
    %v275 = vsub.f32 %v263, %v165
    %v276 = vsub.f32 %v264, %v166
    %v277 = vsub.f32 %v265, %v167
    %v278 = vsub.f32 %v266, %v199
    %v279 = vsub.f32 %v267, %v171
    %v280 = vsub.f32 %v268, %v200
    %v281 = vsub.f32 %v269, %v174
    %v282 = vsub.f32 %v270, %v201
    %v283 = vsub.f32 %v271, %v177
    %v284 = vsub.f32 %v272, %v202
    %v285 = vsub.f32 %v273, %v180
    %v286 = vsub.f32 %v274, %v203
    %v287 = vsub.f32 %v275, %v183
    %v288 = vsub.f32 %v276, %v204
    %v289 = vsub.f32 %v277, %v186
    %v290 = vsub.f32 %v278, %v208
    %v291 = vsub.f32 %v279, %v236
    %v292 = vsub.f32 %v280, %v211
    %v293 = vsub.f32 %v281, %v237
    %v294 = vsub.f32 %v282, %v214
    %v295 = vsub.f32 %v283, %v238
    %v296 = vsub.f32 %v284, %v217
    %v297 = vsub.f32 %v285, %v239
    %v298 = vsub.f32 %v286, %v220
    %v299 = vsub.f32 %v287, %v240
    %v300 = vsub.f32 %v288, %v223
    %v301 = vsub.f32 %v289, %v241
    %v302 = vmul.f32 %v290, %v56
    %v303 = vmul.f32 %v291, %v57
    %v304 = vmul.f32 %v292, %v56
    %v305 = vmul.f32 %v293, %v57
    %v306 = vmul.f32 %v294, %v56
    %v307 = vmul.f32 %v295, %v57
    %v308 = vmul.f32 %v296, %v56
    %v309 = vmul.f32 %v297, %v57
    %v310 = vmul.f32 %v298, %v56
    %v311 = vmul.f32 %v299, %v57
    %v312 = vmul.f32 %v300, %v56
    %v313 = vmul.f32 %v301, %v57
    %v314 = vmul.f32 %v302, %v302
    %v315 = vmul.f32 %v303, %v303
    %v316 = vmul.f32 %v308, %v308
    %v317 = vmul.f32 %v309, %v309
    %v318 = vmul.f32 %v304, %v304
    %v319 = vmul.f32 %v305, %v305
    %v320 = vmul.f32 %v310, %v310
    %v321 = vmul.f32 %v311, %v311
    %v322 = vadd.f32 %v314, %v318
    %v323 = vadd.f32 %v315, %v319
    %v324 = vadd.f32 %v316, %v320
    %v325 = vadd.f32 %v317, %v321
    %v326 = vmul.f32 %v306, %v306
    %v327 = vmul.f32 %v307, %v307
    %v328 = vmul.f32 %v312, %v312
    %v329 = vmul.f32 %v313, %v313
    %v330 = vadd.f32 %v322, %v326
    %v331 = vadd.f32 %v323, %v327
    %v332 = vadd.f32 %v324, %v328
    %v333 = vadd.f32 %v325, %v329
    %v334 = vrsqrt.pop %v330
    %v335 = vmul.f32 %v334, %v330
    %v336 = vmul.f32 %v335, %v334
    %v337 = vmul.f32 0.5, %v336
    %v338 = vsub.f32 1.5, %v337
    %v339 = vmul.f32 %v334, %v338
    %v340 = vmul.f32 %v330, %v339
    %vm341 = vcmp.eq.f32.partialorder %v330, inf
    %v342 = vsel %vm341, %v330, %v340
    %vm343 = vcmp.eq.f32.partialorder %v330, 0.0
    %v344 = vand.u32 %v330, 2147483648
    %v345 = vsel %vm343, %v344, %v342
    %v346 = vrsqrt.pop %v331
    %v347 = vmul.f32 %v346, %v331
    %v348 = vmul.f32 %v347, %v346
    %v349 = vmul.f32 0.5, %v348
    %v350 = vsub.f32 1.5, %v349
    %v351 = vmul.f32 %v346, %v350
    %v352 = vmul.f32 %v331, %v351
    %vm353 = vcmp.eq.f32.partialorder %v331, inf
    %v354 = vsel %vm353, %v331, %v352
    %vm355 = vcmp.eq.f32.partialorder %v331, 0.0
    %v356 = vand.u32 %v331, 2147483648
    %v357 = vsel %vm355, %v356, %v354
    %v358 = vrsqrt.pop %v332
    %v359 = vmul.f32 %v358, %v332
    %v360 = vmul.f32 %v359, %v358
    %v361 = vmul.f32 0.5, %v360
    %v362 = vsub.f32 1.5, %v361
    %v363 = vmul.f32 %v358, %v362
    %v364 = vmul.f32 %v332, %v363
    %vm365 = vcmp.eq.f32.partialorder %v332, inf
    %v366 = vsel %vm365, %v332, %v364
    %vm367 = vcmp.eq.f32.partialorder %v332, 0.0
    %v368 = vand.u32 %v332, 2147483648
    %v369 = vsel %vm367, %v368, %v366
    %v370 = vrsqrt.pop %v333
    %v371 = vmul.f32 %v370, %v333
    %v372 = vmul.f32 %v371, %v370
    %v373 = vmul.f32 0.5, %v372
    %v374 = vsub.f32 1.5, %v373
    %v375 = vmul.f32 %v370, %v374
    %v376 = vmul.f32 %v333, %v375
    %vm377 = vcmp.eq.f32.partialorder %v333, inf
    %v378 = vsel %vm377, %v333, %v376
    %vm379 = vcmp.eq.f32.partialorder %v333, 0.0
    %v380 = vand.u32 %v333, 2147483648
    %v381 = vsel %vm379, %v380, %v378
    %vm382 = vcmask 130048
    %v383 = vsel %vm382, %v345, 0.0
    %v384 = vsel %vm382, %v357, 0.0
    %v385 = vadd.f32 %v383, %v384
    %v386 = vsel %vm382, %v369, 0.0
    %v387 = vadd.f32 %v385, %v386
    %v388 = vsel %vm382, %v381, 0.0
    %v389 = vadd.f32 %v387, %v388
    %390 = vadd.xlane.f32.xlu0 %v389
    %v391 = vpop.xlane.xlu0 %390
    %v392 = vrot.slane %v391, 4
    %v393 = vadd.f32 %v391, %v392
    %v394 = vrot.slane %v393, 2
    %v395 = vadd.f32 %v393, %v394
    %v396 = vrot.slane %v395, 1
    %v397 = vadd.f32 %v395, %v396
    %s398 = vtos %v397
    %p399 = scmp.eq.s32.totalorder 0, 0
    // Predicated region
    $region18: #{tpu_custom_call.1} parent=1 // pred_check
      %p400 = pneg %p399
    $region19: #{tpu_custom_call.1} parent=1 // pred_check_branch
      %402 = sbr.rel (%p400) target = $region21
    $region20: #{tpu_custom_call.1} parent=1 // pred_region
      %vm403 = vcmask 0
      %404 = vst.msk [vmem:[#allocation7] sm:$0x1] %vm403, 0.0
    $region21: #{tpu_custom_call.1} parent=1 // pred_fallthru
      _
    %v405 = vld [vmem:[#allocation7] sm:$0x1]
    %v406 = vstv %s398
    %v407 = vadd.f32 %v405, %v406
    %vm408 = vcmask 0
    %409 = vst.msk [vmem:[#allocation7] sm:$0x1] %vm408, %v407
    // Predicated region
    $region22: #{tpu_custom_call.1} parent=1 // pred_check
      %p410 = pneg %p399
    $region23: #{tpu_custom_call.1} parent=1 // pred_check_branch
      %412 = sbr.rel (%p410) target = $region25
    $region24: #{tpu_custom_call.1} parent=1 // pred_region
      %v413 = vld [vmem:[#allocation7] sm:$0x1]
      %v414 = vmul.f32 %v413, 0.001953125
      %415 = vst.msk [vmem:[#allocation7] sm:$0x1] %vm408, %v414
    $region25: #{tpu_custom_call.1} parent=1 // pred_fallthru
      _
    // Predicated region
    $region26: #{tpu_custom_call.1} parent=1 // pred_check
      _
    $region27: #{tpu_custom_call.1} parent=1 // pred_check_branch
      %417 = sbr.rel (0) target = $region29
    $region28: #{tpu_custom_call.1} parent=1 // pred_region
      %419 = vsyncadd [#allocation4], 0
      %s421 = sshll.u32 [#allocation7], 4
      %s422 = int_to_ptr.vmem [resolvable:$true] %s421
      %s423 = sshll.u32 %s2, 4
      %s424 = int_to_ptr.hbm [resolvable:$true] %s423
      %426 = dma.vmem_to_hbm [thread:$0]  %s422, 16, %s424, [#allocation4]
    $region29: #{tpu_custom_call.1} parent=1 // pred_fallthru
      _
    // Predicated region
    $region30: #{tpu_custom_call.1} parent=1 // pred_check
      _
    $region31: #{tpu_custom_call.1} parent=1 // pred_check_branch
      %428 = sbr.rel (0) target = $region33
    $region32: #{tpu_custom_call.1} parent=1 // pred_region
      %430 = dma.done [#allocation4], 16
    $region33: #{tpu_custom_call.1} parent=1 // pred_fallthru
      _
    %431 = vsyncpa [#allocation3], 1
    %432 = vsyncpa [#allocation6], 1
    %433 = vsyncpa [#allocation4], 1

</llo_original>
